<compile_context>
chip_gen: v5e
topology: v5e:2x2
jax: 0.10.0
libtpu: 0.0.40
codegen_flags: <defaults>
</compile_context>

<pallas_src>
import jax
import jax.numpy as jnp
from jax.experimental import pallas as pl
from jax.experimental.pallas import tpu as pltpu

INPUT_DIM = 768
HIDDEN_DIM = 256
OUT_PAD = 128            # pad the 1-wide output to a full lane width (lane-dense store)
DEFAULT_BLOCK_B = 1024   # batch rows per grid step for large batches (sweep 1024-2048)


def _cdiv(a, b):
    return -(-a // b)


def _round_up(x, m):
    return ((x + m - 1) // m) * m


def value_net_kernel(x_ref, w1_ref, b1_ref, w2_ref, b2_ref, w3_ref, b3_ref, o_ref):
    # Layer 1: (TB, 768) @ (768, 256), bf16 operands, f32 accumulation on MXU.
    x = x_ref[...]
    if x.dtype != jnp.bfloat16:
        x = x.astype(jnp.bfloat16)
    h1 = jnp.dot(x, w1_ref[...], preferred_element_type=jnp.float32)
    h1 = jnp.maximum(h1 + b1_ref[...], 0.0)
    # Layer 2: (TB, 256) @ (256, 256)
    h2 = jnp.dot(h1.astype(jnp.bfloat16), w2_ref[...],
                 preferred_element_type=jnp.float32)
    h2 = jnp.maximum(h2 + b2_ref[...], 0.0)
    # Layer 3: (TB, 256) @ (256, 128) -- only column 0 is real; the zero-padded
    # columns stay exactly zero and keep the store 128-lane dense.
    o = jnp.dot(h2.astype(jnp.bfloat16), w3_ref[...],
                preferred_element_type=jnp.float32)
    o_ref[...] = (o + b3_ref[...]).astype(o_ref.dtype)


def prepare_params(params):
    """One-time prep: bf16 weights; pad layer-3 weight/bias to 128 lanes; biases f32."""
    w1, b1, w2, b2, w3, b3 = params
    w3_p = jnp.zeros((HIDDEN_DIM, OUT_PAD), jnp.float32).at[:, :1].set(w3)
    b3_p = jnp.zeros((1, OUT_PAD), jnp.float32).at[:, :1].set(b3.reshape(1, -1))
    return (
        w1.astype(jnp.bfloat16),
        b1.reshape(1, -1).astype(jnp.float32),
        w2.astype(jnp.bfloat16),
        b2.reshape(1, -1).astype(jnp.float32),
        w3_p.astype(jnp.bfloat16),
        b3_p,
    )


def value_network_forward(state, prepared_params, *, block_b=DEFAULT_BLOCK_B):
    """state: (B, INPUT_DIM), f32 or (preferably) bf16  ->  (B, 1) float32."""
    w1, b1, w2, b2, w3p, b3p = prepared_params
    B = state.shape[0]
    in_itemsize = jnp.dtype(state.dtype).itemsize
    out_dtype = jnp.bfloat16
    out_itemsize = jnp.dtype(out_dtype).itemsize
    # bf16 inputs pack 16 rows per sublane-tile; f32 uses 8.
    sublane = 16 if state.dtype == jnp.bfloat16 else 8

    # Number of batch tiles: enough to cover B with <= block_b rows each, and at
    # least 2 for mid/large batches so both v7x TensorCores participate.
    nt = max(1, _cdiv(B, block_b))
    if nt == 1 and B >= 256:
        nt = 2
    tb = _round_up(_cdiv(B, nt), sublane)
    grid = (_cdiv(B, tb),)  # ragged final block handled by Pallas (masked stores)

    const = lambda i: (0, 0)  # weights/biases: same block every step (VMEM-resident)

    weight_bytes = (INPUT_DIM * HIDDEN_DIM
                    + HIDDEN_DIM * HIDDEN_DIM
                    + HIDDEN_DIM * OUT_PAD) * 2
    bias_bytes = (HIDDEN_DIM + HIDDEN_DIM + OUT_PAD) * 4
    flops = 2 * B * (INPUT_DIM * HIDDEN_DIM
                     + HIDDEN_DIM * HIDDEN_DIM
                     + HIDDEN_DIM * OUT_PAD)
    bytes_accessed = (B * INPUT_DIM * in_itemsize      # activation stream in
                      + B * OUT_PAD * out_itemsize     # padded bf16 output
                      + weight_bytes + bias_bytes)

    # Explicit scoped-VMEM budget: double-buffered x / out tiles + weights.
    # (v5e's default scoped limit is only 16 MiB; v6e/v7x default to 32 MiB.)
    vmem_est = (2 * tb * INPUT_DIM * in_itemsize
                + 2 * tb * OUT_PAD * out_itemsize
                + 2 * (weight_bytes + bias_bytes))
    vmem_limit = int(min(64 << 20, max(2 * vmem_est, 32 << 20)))

    out_padded = pl.pallas_call(
        value_net_kernel,
        out_shape=jax.ShapeDtypeStruct((B, OUT_PAD), out_dtype),
        grid_spec=pltpu.PrefetchScalarGridSpec(
            num_scalar_prefetch=0,
            grid=grid,
            in_specs=[
                pl.BlockSpec((tb, INPUT_DIM), lambda i: (i, 0)),       # x tile (streamed)
                pl.BlockSpec((INPUT_DIM, HIDDEN_DIM), const),          # w1 (bf16)
                pl.BlockSpec((1, HIDDEN_DIM), const),                  # b1
                pl.BlockSpec((HIDDEN_DIM, HIDDEN_DIM), const),         # w2 (bf16)
                pl.BlockSpec((1, HIDDEN_DIM), const),                  # b2
                pl.BlockSpec((HIDDEN_DIM, OUT_PAD), const),            # w3 padded (bf16)
                pl.BlockSpec((1, OUT_PAD), const),                     # b3 padded
            ],
            out_specs=pl.BlockSpec((tb, OUT_PAD), lambda i: (i, 0)),
        ),
        compiler_params=pltpu.CompilerParams(
            dimension_semantics=("parallel",),   # batch tiles are independent
            vmem_limit_bytes=vmem_limit,
        ),
        cost_estimate=pl.CostEstimate(
            flops=flops, transcendentals=0, bytes_accessed=bytes_accessed),
    )(state, w1, b1, w2, b2, w3p, b3p)

    # Tiny slice + cast outside the kernel; only column 0 is real.
    return out_padded[:B, :1].astype(jnp.float32)


def init_params(key, input_dim=INPUT_DIM, hidden_dim=HIDDEN_DIM):
    """Deterministic init mimicking torch.nn.Linear default U(-1/sqrt(fan_in), ...)."""
    ks = jax.random.split(key, 6)

    def lin(kw, kb, fan_in, fan_out):
        bound = 1.0 / jnp.sqrt(fan_in)
        w = jax.random.uniform(kw, (fan_in, fan_out), jnp.float32, -bound, bound)
        b = jax.random.uniform(kb, (fan_out,), jnp.float32, -bound, bound)
        return w, b

    w1, b1 = lin(ks[0], ks[1], input_dim, hidden_dim)
    w2, b2 = lin(ks[2], ks[3], hidden_dim, hidden_dim)
    w3, b3 = lin(ks[4], ks[5], hidden_dim, 1)
    return (w1, b1, w2, b2, w3, b3)


def reference_forward_bf16(state, params):
    """Mirrors the kernel's math: bf16 operands, f32 accumulate, bf16 output store."""
    w1, b1, w2, b2, w3, b3 = params
    f32 = jnp.float32
    x = state.astype(jnp.bfloat16)
    h1 = jnp.maximum(
        jnp.dot(x, w1.astype(jnp.bfloat16), preferred_element_type=f32) + b1, 0.0)
    h2 = jnp.maximum(
        jnp.dot(h1.astype(jnp.bfloat16), w2.astype(jnp.bfloat16),
                preferred_element_type=f32) + b2, 0.0)
    o = jnp.dot(h2.astype(jnp.bfloat16), w3.astype(jnp.bfloat16),
                preferred_element_type=f32) + b3
    return o.astype(jnp.bfloat16).astype(f32)


def reference_forward_f32(state, params):
    w1, b1, w2, b2, w3, b3 = params
    s = state.astype(jnp.float32)
    h1 = jnp.maximum(s @ w1 + b1, 0.0)
    h2 = jnp.maximum(h1 @ w2 + b2, 0.0)
    return h2 @ w3 + b3


if __name__ == "__main__":
    key = jax.random.PRNGKey(0)
    k_params, k_x1, k_x2, k_x3 = jax.random.split(key, 4)

    params = init_params(k_params)
    prepared = prepare_params(params)   # one-time: bf16 cast + lane-pad of layer 3

    # 1) bf16 activation stream (producer supplies bf16), sublane-aligned batch.
    B1 = 16
    state1 = jax.random.normal(k_x1, (B1, INPUT_DIM), jnp.bfloat16)
    out1 = jax.block_until_ready(value_network_forward(state1, prepared))
    assert out1.shape == (B1, 1), out1.shape
    ref1 = reference_forward_bf16(state1, params)
    assert jnp.allclose(out1, ref1, atol=2e-2, rtol=2e-2), "mismatch vs bf16 reference"
    assert jnp.allclose(out1, reference_forward_f32(state1, params),
                        atol=1e-1, rtol=1e-1), "mismatch vs f32 reference"

    # 2) Ragged batch (not a multiple of 16) exercises the masked final block.
    B2 = 13
    state2 = jax.random.normal(k_x2, (B2, INPUT_DIM), jnp.bfloat16)
    out2 = jax.block_until_ready(value_network_forward(state2, prepared))
    assert out2.shape == (B2, 1), out2.shape
    ref2 = reference_forward_bf16(state2, params)
    assert jnp.allclose(out2, ref2, atol=2e-2, rtol=2e-2), "mismatch vs bf16 reference (B=13)"

    # 3) f32 input path (in-kernel cast) still supported.
    B3 = 8
    state3 = jax.random.normal(k_x3, (B3, INPUT_DIM), jnp.float32)
    out3 = jax.block_until_ready(value_network_forward(state3, prepared))
    assert out3.shape == (B3, 1), out3.shape
    ref3 = reference_forward_bf16(state3, params)
    assert jnp.allclose(out3, ref3, atol=2e-2, rtol=2e-2), "mismatch vs bf16 reference (f32 in)"

    print("KERNEL_OK")
</pallas_src>

<mosaic_0001>
module attributes {stable_mosaic.version = 11 : i64} {
  func.func @value_net_kernel(%arg0: i32, %arg1: memref<16x768xbf16, #tpu.memory_space<vmem>>, %arg2: memref<768x256xbf16, #tpu.memory_space<vmem>>, %arg3: memref<1x256xf32, #tpu.memory_space<vmem>>, %arg4: memref<256x256xbf16, #tpu.memory_space<vmem>>, %arg5: memref<1x256xf32, #tpu.memory_space<vmem>>, %arg6: memref<256x128xbf16, #tpu.memory_space<vmem>>, %arg7: memref<1x128xf32, #tpu.memory_space<vmem>>, %arg8: memref<16x128xbf16, #tpu.memory_space<vmem>>) attributes {dimension_semantics = [#tpu.dimension_semantics<parallel>], iteration_bounds = array<i64: 1>, scalar_prefetch = 0 : i64, scratch_operands = 0 : i64, tpu.core_type = #tpu.core_type<tc>, window_params = [{transform_indices = @transform_0, window_bounds = array<i64: 16, 768>}, {pipeline_mode = #tpu.pipeline_mode<synchronous>, transform_indices = @transform_1, window_bounds = array<i64: 768, 256>}, {pipeline_mode = #tpu.pipeline_mode<synchronous>, transform_indices = @transform_2, window_bounds = array<i64: 1, 256>}, {pipeline_mode = #tpu.pipeline_mode<synchronous>, transform_indices = @transform_3, window_bounds = array<i64: 256, 256>}, {pipeline_mode = #tpu.pipeline_mode<synchronous>, transform_indices = @transform_4, window_bounds = array<i64: 1, 256>}, {pipeline_mode = #tpu.pipeline_mode<synchronous>, transform_indices = @transform_5, window_bounds = array<i64: 256, 128>}, {pipeline_mode = #tpu.pipeline_mode<synchronous>, transform_indices = @transform_6, window_bounds = array<i64: 1, 128>}, {transform_indices = @transform_7, window_bounds = array<i64: 16, 128>}]} {
    %c0 = arith.constant 0 : index
    %c0_0 = arith.constant 0 : index
    %0 = vector.load %arg1[%c0, %c0_0] : memref<16x768xbf16, #tpu.memory_space<vmem>>, vector<16x768xbf16>
    %c0_1 = arith.constant 0 : index
    %c0_2 = arith.constant 0 : index
    %1 = vector.load %arg2[%c0_1, %c0_2] : memref<768x256xbf16, #tpu.memory_space<vmem>>, vector<768x256xbf16>
    %cst = arith.constant dense<0.000000e+00> : vector<16x256xf32>
    %2 = tpu.matmul %0, %1, %cst {dimension_numbers = #tpu.dot_dimension_numbers<[1], [0], [0], [1], [0, 0, 1, 1], [], []>} : vector<16x768xbf16>, vector<768x256xbf16>, vector<16x256xf32> -> vector<16x256xf32>
    %c0_3 = arith.constant 0 : index
    %c0_4 = arith.constant 0 : index
    %3 = vector.load %arg3[%c0_3, %c0_4] : memref<1x256xf32, #tpu.memory_space<vmem>>, vector<1x256xf32>
    %4 = vector.broadcast %3 : vector<1x256xf32> to vector<16x256xf32>
    %5 = arith.addf %2, %4 : vector<16x256xf32>
    %cst_5 = arith.constant 0.000000e+00 : f32
    %6 = vector.broadcast %cst_5 : f32 to vector<16x256xf32>
    %7 = arith.maximumf %5, %6 : vector<16x256xf32>
    %8 = arith.truncf %7 : vector<16x256xf32> to vector<16x256xbf16>
    %c0_6 = arith.constant 0 : index
    %c0_7 = arith.constant 0 : index
    %9 = vector.load %arg4[%c0_6, %c0_7] : memref<256x256xbf16, #tpu.memory_space<vmem>>, vector<256x256xbf16>
    %cst_8 = arith.constant dense<0.000000e+00> : vector<16x256xf32>
    %10 = tpu.matmul %8, %9, %cst_8 {dimension_numbers = #tpu.dot_dimension_numbers<[1], [0], [0], [1], [0, 0, 1, 1], [], []>} : vector<16x256xbf16>, vector<256x256xbf16>, vector<16x256xf32> -> vector<16x256xf32>
    %c0_9 = arith.constant 0 : index
    %c0_10 = arith.constant 0 : index
    %11 = vector.load %arg5[%c0_9, %c0_10] : memref<1x256xf32, #tpu.memory_space<vmem>>, vector<1x256xf32>
    %12 = vector.broadcast %11 : vector<1x256xf32> to vector<16x256xf32>
    %13 = arith.addf %10, %12 : vector<16x256xf32>
    %cst_11 = arith.constant 0.000000e+00 : f32
    %14 = vector.broadcast %cst_11 : f32 to vector<16x256xf32>
    %15 = arith.maximumf %13, %14 : vector<16x256xf32>
    %16 = arith.truncf %15 : vector<16x256xf32> to vector<16x256xbf16>
    %c0_12 = arith.constant 0 : index
    %c0_13 = arith.constant 0 : index
    %17 = vector.load %arg6[%c0_12, %c0_13] : memref<256x128xbf16, #tpu.memory_space<vmem>>, vector<256x128xbf16>
    %cst_14 = arith.constant dense<0.000000e+00> : vector<16x128xf32>
    %18 = tpu.matmul %16, %17, %cst_14 {dimension_numbers = #tpu.dot_dimension_numbers<[1], [0], [0], [1], [0, 0, 1, 1], [], []>} : vector<16x256xbf16>, vector<256x128xbf16>, vector<16x128xf32> -> vector<16x128xf32>
    %c0_15 = arith.constant 0 : index
    %c0_16 = arith.constant 0 : index
    %19 = vector.load %arg7[%c0_15, %c0_16] : memref<1x128xf32, #tpu.memory_space<vmem>>, vector<1x128xf32>
    %20 = vector.broadcast %19 : vector<1x128xf32> to vector<16x128xf32>
    %21 = arith.addf %18, %20 : vector<16x128xf32>
    %22 = arith.truncf %21 : vector<16x128xf32> to vector<16x128xbf16>
    %c0_17 = arith.constant 0 : index
    %c0_18 = arith.constant 0 : index
    %23 = vector.load %arg8[%c0_17, %c0_18] : memref<16x128xbf16, #tpu.memory_space<vmem>>, vector<16x128xbf16>
    tpu.vector_store %arg8[%c0_17, %c0_18], %22 {strides = array<i32>} : memref<16x128xbf16, #tpu.memory_space<vmem>>, vector<16x128xbf16>,
    return
  }
  func.func @transform_0(%arg0: i32) -> (i32, i32) {
    %c0_i32 = arith.constant 0 : i32
    %c0_i32_0 = arith.constant 0 : i32
    return %arg0, %c0_i32 : i32, i32
  }
  func.func @transform_1(%arg0: i32) -> (i32, i32) {
    %c0_i32 = arith.constant 0 : i32
    %c0_i32_0 = arith.constant 0 : i32
    %c0_i32_1 = arith.constant 0 : i32
    return %c0_i32, %c0_i32_0 : i32, i32
  }
  func.func @transform_2(%arg0: i32) -> (i32, i32) {
    %c0_i32 = arith.constant 0 : i32
    %c0_i32_0 = arith.constant 0 : i32
    %c0_i32_1 = arith.constant 0 : i32
    return %c0_i32, %c0_i32_0 : i32, i32
  }
  func.func @transform_3(%arg0: i32) -> (i32, i32) {
    %c0_i32 = arith.constant 0 : i32
    %c0_i32_0 = arith.constant 0 : i32
    %c0_i32_1 = arith.constant 0 : i32
    return %c0_i32, %c0_i32_0 : i32, i32
  }
  func.func @transform_4(%arg0: i32) -> (i32, i32) {
    %c0_i32 = arith.constant 0 : i32
    %c0_i32_0 = arith.constant 0 : i32
    %c0_i32_1 = arith.constant 0 : i32
    return %c0_i32, %c0_i32_0 : i32, i32
  }
  func.func @transform_5(%arg0: i32) -> (i32, i32) {
    %c0_i32 = arith.constant 0 : i32
    %c0_i32_0 = arith.constant 0 : i32
    %c0_i32_1 = arith.constant 0 : i32
    return %c0_i32, %c0_i32_0 : i32, i32
  }
  func.func @transform_6(%arg0: i32) -> (i32, i32) {
    %c0_i32 = arith.constant 0 : i32
    %c0_i32_0 = arith.constant 0 : i32
    %c0_i32_1 = arith.constant 0 : i32
    return %c0_i32, %c0_i32_0 : i32, i32
  }
  func.func @transform_7(%arg0: i32) -> (i32, i32) {
    %c0_i32 = arith.constant 0 : i32
    %c0_i32_0 = arith.constant 0 : i32
    return %arg0, %c0_i32 : i32, i32
  }
}

</mosaic_0001>

<llo_original>
// kernel: tpu_custom_call.1
$region0: #{tpu_custom_call.1}
  #allocation0 [shape = 'u32[]', space=smem, size = 0x4, offset = 0x4, fixed_abs, tag = 'smem constant byte address 0x4 - core index']
  #allocation1 [shape = 'u32[72,128]{1,0:T(1,128)}', space=vmem, size = 0x9000, scoped, tag = 'internal scratch']
  %s0 = inlined_call_operand.hbm [shape: bf16[16,768], index: 0, kind: input, shape index: {}]
  %s1 = inlined_call_operand.hbm [shape: bf16[768,256], index: 1, kind: input, shape index: {}]
  %s2 = inlined_call_operand.hbm [shape: f32[1,256], index: 2, kind: input, shape index: {}]
  %s3 = inlined_call_operand.hbm [shape: bf16[256,256], index: 3, kind: input, shape index: {}]
  %s4 = inlined_call_operand.vmem [shape: f32[1,256], index: 4, kind: input, shape index: {}]
  %s5 = inlined_call_operand.hbm [shape: bf16[256,128], index: 5, kind: input, shape index: {}]
  %s6 = inlined_call_operand.vmem [shape: f32[1,128], index: 6, kind: input, shape index: {}]
  %s7 = inlined_call_operand.hbm [shape: bf16[16,128], index: 7, kind: output, shape index: {}]
  %s8 = sld [smem:[#allocation0]]
  $region58: #{tpu_custom_call.1} parent=0
    _
  %s10 = ssub.s32 1, %s8
  %s11 = scalar_select 0, %s10, %s8
  $region1: #{tpu_custom_call.1} parent=0
    #allocation2 [shape = 'u8[24576]{0}', space=vmem, size = 0x6000, scoped, tag = 'input window, operand 0, single buffered']
    #allocation3 [shape = 's32[1]{0}', space=sflag, size = 0x4, scoped, tag = 'scoped memory for tpu_custom_call.1']
    #allocation4 [shape = 's32[1]{0}', space=sflag, size = 0x4, scoped, tag = 'scoped memory for tpu_custom_call.1']
    #allocation5 [shape = 'u8[393216]{0}', space=vmem, size = 0x60000, scoped, tag = 'input window, operand 1, single buffered']
    #allocation6 [shape = 's32[1]{0}', space=sflag, size = 0x4, scoped, tag = 'scoped memory for tpu_custom_call.1']
    #allocation7 [shape = 'u8[1024]{0}', space=vmem, size = 0x400, scoped, tag = 'input window, operand 2, single buffered']
    #allocation8 [shape = 'u8[131072]{0}', space=vmem, size = 0x20000, scoped, tag = 'input window, operand 3, single buffered']
    #allocation9 [shape = 's32[1]{0}', space=sflag, size = 0x4, scoped, tag = 'scoped memory for tpu_custom_call.1']
    #allocation10 [shape = 'u8[65536]{0}', space=vmem, size = 0x10000, scoped, tag = 'input window, operand 5, single buffered']
    #allocation11 [shape = 'u8[4096]{0}', space=vmem, size = 0x1000, scoped, tag = 'output window, operand 0, single buffered']
    %12 = vsyncpa [#allocation3], 0
    %13 = vsyncpa [#allocation6], 0
    %14 = vsyncpa [#allocation9], 0
    %15 = vsyncpa [#allocation4], 0
    // Predicated region
    $region2: #{tpu_custom_call.1} parent=1 // pred_check
      _
    $region3: #{tpu_custom_call.1} parent=1 // pred_check_branch
      %17 = sbr.rel (0) target = $region5
    $region4: #{tpu_custom_call.1} parent=1 // pred_region
      %19 = vsyncadd [#allocation3], 0
      %s20 = sshll.u32 %s0, 4
      %s21 = int_to_ptr.hbm [resolvable:$true] %s20
      %s22 = sshll.u32 [#allocation2], 4
      %s23 = int_to_ptr.vmem [resolvable:$true] %s22
      %28 = dma.hbm_to_vmem [thread:$0]  %s21, 768, %s23, [#allocation3], 384, 384, 24
    $region5: #{tpu_custom_call.1} parent=1 // pred_fallthru
      _
    // Predicated region
    $region6: #{tpu_custom_call.1} parent=1 // pred_check
      _
    $region7: #{tpu_custom_call.1} parent=1 // pred_check_branch
      %30 = sbr.rel (0) target = $region9
    $region8: #{tpu_custom_call.1} parent=1 // pred_region
      %32 = vsyncadd [#allocation6], 0
      %s33 = sshll.u32 %s1, 4
      %s34 = int_to_ptr.hbm [resolvable:$true] %s33
      %s35 = sshll.u32 [#allocation5], 4
      %s36 = int_to_ptr.vmem [resolvable:$true] %s35
      %41 = dma.hbm_to_vmem [thread:$0]  %s34, 12288, %s36, [#allocation6], 128, 128, 8
    $region9: #{tpu_custom_call.1} parent=1 // pred_fallthru
      _
    // Predicated region
    $region10: #{tpu_custom_call.1} parent=1 // pred_check
      _
    $region11: #{tpu_custom_call.1} parent=1 // pred_check_branch
      %43 = sbr.rel (0) target = $region13
    $region12: #{tpu_custom_call.1} parent=1 // pred_region
      %45 = vsyncadd [#allocation6], 0
      %s47 = sshll.u32 %s2, 4
      %s48 = int_to_ptr.hbm [resolvable:$true] %s47
      %s49 = sshll.u32 [#allocation7], 4
      %s50 = int_to_ptr.vmem [resolvable:$true] %s49
      %52 = dma.hbm_to_vmem [thread:$0]  %s48, 32, %s50, [#allocation6]
    $region13: #{tpu_custom_call.1} parent=1 // pred_fallthru
      _
    // Predicated region
    $region14: #{tpu_custom_call.1} parent=1 // pred_check
      _
    $region15: #{tpu_custom_call.1} parent=1 // pred_check_branch
      %54 = sbr.rel (0) target = $region17
    $region16: #{tpu_custom_call.1} parent=1 // pred_region
      %56 = vsyncadd [#allocation9], 0
      %s57 = sshll.u32 %s3, 4
      %s58 = int_to_ptr.hbm [resolvable:$true] %s57
      %s59 = sshll.u32 [#allocation8], 4
      %s60 = int_to_ptr.vmem [resolvable:$true] %s59
      %65 = dma.hbm_to_vmem [thread:$0]  %s58, 4096, %s60, [#allocation9], 128, 128, 8
    $region17: #{tpu_custom_call.1} parent=1 // pred_fallthru
      _
    // Predicated region
    $region18: #{tpu_custom_call.1} parent=1 // pred_check
      _
    $region19: #{tpu_custom_call.1} parent=1 // pred_check_branch
      %67 = sbr.rel (0) target = $region21
    $region20: #{tpu_custom_call.1} parent=1 // pred_region
      _
    $region21: #{tpu_custom_call.1} parent=1 // pred_fallthru
      _
    // Predicated region
    $region22: #{tpu_custom_call.1} parent=1 // pred_check
      _
    $region23: #{tpu_custom_call.1} parent=1 // pred_check_branch
      %69 = sbr.rel (0) target = $region25
    $region24: #{tpu_custom_call.1} parent=1 // pred_region
      %71 = vsyncadd [#allocation9], 0
      %s72 = sshll.u32 %s5, 4
      %s73 = int_to_ptr.hbm [resolvable:$true] %s72
      %s74 = sshll.u32 [#allocation10], 4
      %s75 = int_to_ptr.vmem [resolvable:$true] %s74
      %80 = dma.hbm_to_vmem [thread:$0]  %s73, 2048, %s75, [#allocation9], 64, 64, 4
    $region25: #{tpu_custom_call.1} parent=1 // pred_fallthru
      _
    // Predicated region
    $region26: #{tpu_custom_call.1} parent=1 // pred_check
      _
    $region27: #{tpu_custom_call.1} parent=1 // pred_check_branch
      %82 = sbr.rel (0) target = $region29
    $region28: #{tpu_custom_call.1} parent=1 // pred_region
      _
    $region29: #{tpu_custom_call.1} parent=1 // pred_fallthru
      _
    // Predicated region
    $region30: #{tpu_custom_call.1} parent=1 // pred_check
      _
    $region31: #{tpu_custom_call.1} parent=1 // pred_check_branch
      %84 = sbr.rel (0) target = $region33
    $region32: #{tpu_custom_call.1} parent=1 // pred_region
      %86 = dma.done [#allocation3], 768
    $region33: #{tpu_custom_call.1} parent=1 // pred_fallthru
      _
    // Predicated region
    $region34: #{tpu_custom_call.1} parent=1 // pred_check
      _
    $region35: #{tpu_custom_call.1} parent=1 // pred_check_branch
      %88 = sbr.rel (0) target = $region37
    $region36: #{tpu_custom_call.1} parent=1 // pred_region
      %90 = dma.done [#allocation6], 12288
    $region37: #{tpu_custom_call.1} parent=1 // pred_fallthru
      _
    // Predicated region
    $region38: #{tpu_custom_call.1} parent=1 // pred_check
      _
    $region39: #{tpu_custom_call.1} parent=1 // pred_check_branch
      %92 = sbr.rel (0) target = $region41
    $region40: #{tpu_custom_call.1} parent=1 // pred_region
      %94 = dma.done [#allocation6], 32
    $region41: #{tpu_custom_call.1} parent=1 // pred_fallthru
      _
    // Predicated region
    $region42: #{tpu_custom_call.1} parent=1 // pred_check
      _
    $region43: #{tpu_custom_call.1} parent=1 // pred_check_branch
      %96 = sbr.rel (0) target = $region45
    $region44: #{tpu_custom_call.1} parent=1 // pred_region
      %98 = dma.done [#allocation9], 4096
    $region45: #{tpu_custom_call.1} parent=1 // pred_fallthru
      _
    // Predicated region
    $region46: #{tpu_custom_call.1} parent=1 // pred_check
      _
    $region47: #{tpu_custom_call.1} parent=1 // pred_check_branch
      %100 = sbr.rel (0) target = $region49
    $region48: #{tpu_custom_call.1} parent=1 // pred_region
      %102 = dma.done [#allocation9], 2048
    $region49: #{tpu_custom_call.1} parent=1 // pred_fallthru
      _
    %v103 = vld [vmem:[#allocation2] sm:$0xff]
    %v104 = vld [vmem:[#allocation2 + $0x8] sm:$0xff]
    %v105 = vld [vmem:[#allocation2 + $0x10] sm:$0xff]
    %v106 = vld [vmem:[#allocation2 + $0x18] sm:$0xff]
    %v107 = vld [vmem:[#allocation2 + $0x20] sm:$0xff]
    %v108 = vld [vmem:[#allocation2 + $0x28] sm:$0xff]
    %v109 = vld [vmem:[#allocation5] sm:$0xff]
    %v110 = vld [vmem:[#allocation5 + $0x8] sm:$0xff]
    %v111 = vld [vmem:[#allocation5 + $0x10] sm:$0xff]
    %v112 = vld [vmem:[#allocation5 + $0x18] sm:$0xff]
    %v113 = vld [vmem:[#allocation5 + $0x20] sm:$0xff]
    %v114 = vld [vmem:[#allocation5 + $0x28] sm:$0xff]
    %v115 = vld [vmem:[#allocation5 + $0x30] sm:$0xff]
    %v116 = vld [vmem:[#allocation5 + $0x38] sm:$0xff]
    %v117 = vld [vmem:[#allocation5 + $0x40] sm:$0xff]
    %v118 = vld [vmem:[#allocation5 + $0x48] sm:$0xff]
    %v119 = vld [vmem:[#allocation5 + $0x50] sm:$0xff]
    %v120 = vld [vmem:[#allocation5 + $0x58] sm:$0xff]
    %v121 = vld [vmem:[#allocation5 + $0x60] sm:$0xff]
    %v122 = vld [vmem:[#allocation5 + $0x68] sm:$0xff]
    %v123 = vld [vmem:[#allocation5 + $0x70] sm:$0xff]
    %v124 = vld [vmem:[#allocation5 + $0x78] sm:$0xff]
    %v125 = vld [vmem:[#allocation5 + $0x80] sm:$0xff]
    %v126 = vld [vmem:[#allocation5 + $0x88] sm:$0xff]
    %v127 = vld [vmem:[#allocation5 + $0x90] sm:$0xff]
    %v128 = vld [vmem:[#allocation5 + $0x98] sm:$0xff]
    %v129 = vld [vmem:[#allocation5 + $0xa0] sm:$0xff]
    %v130 = vld [vmem:[#allocation5 + $0xa8] sm:$0xff]
    %v131 = vld [vmem:[#allocation5 + $0xb0] sm:$0xff]
    %v132 = vld [vmem:[#allocation5 + $0xb8] sm:$0xff]
    %v133 = vld [vmem:[#allocation5 + $0xc0] sm:$0xff]
    %v134 = vld [vmem:[#allocation5 + $0xc8] sm:$0xff]
    %v135 = vld [vmem:[#allocation5 + $0xd0] sm:$0xff]
    %v136 = vld [vmem:[#allocation5 + $0xd8] sm:$0xff]
    %v137 = vld [vmem:[#allocation5 + $0xe0] sm:$0xff]
    %v138 = vld [vmem:[#allocation5 + $0xe8] sm:$0xff]
    %v139 = vld [vmem:[#allocation5 + $0xf0] sm:$0xff]
    %v140 = vld [vmem:[#allocation5 + $0xf8] sm:$0xff]
    %v141 = vld [vmem:[#allocation5 + $0x100] sm:$0xff]
    %v142 = vld [vmem:[#allocation5 + $0x108] sm:$0xff]
    %v143 = vld [vmem:[#allocation5 + $0x110] sm:$0xff]
    %v144 = vld [vmem:[#allocation5 + $0x118] sm:$0xff]
    %v145 = vld [vmem:[#allocation5 + $0x120] sm:$0xff]
    %v146 = vld [vmem:[#allocation5 + $0x128] sm:$0xff]
    %v147 = vld [vmem:[#allocation5 + $0x130] sm:$0xff]
    %v148 = vld [vmem:[#allocation5 + $0x138] sm:$0xff]
    %v149 = vld [vmem:[#allocation5 + $0x140] sm:$0xff]
    %v150 = vld [vmem:[#allocation5 + $0x148] sm:$0xff]
    %v151 = vld [vmem:[#allocation5 + $0x150] sm:$0xff]
    %v152 = vld [vmem:[#allocation5 + $0x158] sm:$0xff]
    %v153 = vld [vmem:[#allocation5 + $0x160] sm:$0xff]
    %v154 = vld [vmem:[#allocation5 + $0x168] sm:$0xff]
    %v155 = vld [vmem:[#allocation5 + $0x170] sm:$0xff]
    %v156 = vld [vmem:[#allocation5 + $0x178] sm:$0xff]
    %v157 = vld [vmem:[#allocation5 + $0x180] sm:$0xff]
    %v158 = vld [vmem:[#allocation5 + $0x188] sm:$0xff]
    %v159 = vld [vmem:[#allocation5 + $0x190] sm:$0xff]
    %v160 = vld [vmem:[#allocation5 + $0x198] sm:$0xff]
    %v161 = vld [vmem:[#allocation5 + $0x1a0] sm:$0xff]
    %v162 = vld [vmem:[#allocation5 + $0x1a8] sm:$0xff]
    %v163 = vld [vmem:[#allocation5 + $0x1b0] sm:$0xff]
    %v164 = vld [vmem:[#allocation5 + $0x1b8] sm:$0xff]
    %v165 = vld [vmem:[#allocation5 + $0x1c0] sm:$0xff]
    %v166 = vld [vmem:[#allocation5 + $0x1c8] sm:$0xff]
    %v167 = vld [vmem:[#allocation5 + $0x1d0] sm:$0xff]
    %v168 = vld [vmem:[#allocation5 + $0x1d8] sm:$0xff]
    %v169 = vld [vmem:[#allocation5 + $0x1e0] sm:$0xff]
    %v170 = vld [vmem:[#allocation5 + $0x1e8] sm:$0xff]
    %v171 = vld [vmem:[#allocation5 + $0x1f0] sm:$0xff]
    %v172 = vld [vmem:[#allocation5 + $0x1f8] sm:$0xff]
    %v173 = vld [vmem:[#allocation5 + $0x200] sm:$0xff]
    %v174 = vld [vmem:[#allocation5 + $0x208] sm:$0xff]
    %v175 = vld [vmem:[#allocation5 + $0x210] sm:$0xff]
    %v176 = vld [vmem:[#allocation5 + $0x218] sm:$0xff]
    %v177 = vld [vmem:[#allocation5 + $0x220] sm:$0xff]
    %v178 = vld [vmem:[#allocation5 + $0x228] sm:$0xff]
    %v179 = vld [vmem:[#allocation5 + $0x230] sm:$0xff]
    %v180 = vld [vmem:[#allocation5 + $0x238] sm:$0xff]
    %v181 = vld [vmem:[#allocation5 + $0x240] sm:$0xff]
    %v182 = vld [vmem:[#allocation5 + $0x248] sm:$0xff]
    %v183 = vld [vmem:[#allocation5 + $0x250] sm:$0xff]
    %v184 = vld [vmem:[#allocation5 + $0x258] sm:$0xff]
    %v185 = vld [vmem:[#allocation5 + $0x260] sm:$0xff]
    %v186 = vld [vmem:[#allocation5 + $0x268] sm:$0xff]
    %v187 = vld [vmem:[#allocation5 + $0x270] sm:$0xff]
    %v188 = vld [vmem:[#allocation5 + $0x278] sm:$0xff]
    %v189 = vld [vmem:[#allocation5 + $0x280] sm:$0xff]
    %v190 = vld [vmem:[#allocation5 + $0x288] sm:$0xff]
    %v191 = vld [vmem:[#allocation5 + $0x290] sm:$0xff]
    %v192 = vld [vmem:[#allocation5 + $0x298] sm:$0xff]
    %v193 = vld [vmem:[#allocation5 + $0x2a0] sm:$0xff]
    %v194 = vld [vmem:[#allocation5 + $0x2a8] sm:$0xff]
    %v195 = vld [vmem:[#allocation5 + $0x2b0] sm:$0xff]
    %v196 = vld [vmem:[#allocation5 + $0x2b8] sm:$0xff]
    %v197 = vld [vmem:[#allocation5 + $0x2c0] sm:$0xff]
    %v198 = vld [vmem:[#allocation5 + $0x2c8] sm:$0xff]
    %v199 = vld [vmem:[#allocation5 + $0x2d0] sm:$0xff]
    %v200 = vld [vmem:[#allocation5 + $0x2d8] sm:$0xff]
    %v201 = vld [vmem:[#allocation5 + $0x2e0] sm:$0xff]
    %v202 = vld [vmem:[#allocation5 + $0x2e8] sm:$0xff]
    %v203 = vld [vmem:[#allocation5 + $0x2f0] sm:$0xff]
    %v204 = vld [vmem:[#allocation5 + $0x2f8] sm:$0xff]
    %v205 = vld [vmem:[#allocation7] sm:$0x3]
    %v207 = vperm.slane %v205, 0
    %v208 = vperm.slane %v205, 1
    %v217 = vunpack.c.l.b16 %v103
    %v218 = vunpack.c.h.b16 %v103
    %v219 = vunpack.c.l.b16 %v104
    %v220 = vunpack.c.h.b16 %v104
    %v221 = vunpack.c.l.b16 %v105
    %v222 = vunpack.c.h.b16 %v105
    %v223 = vunpack.c.l.b16 %v106
    %v224 = vunpack.c.h.b16 %v106
    %v225 = vunpack.c.l.b16 %v107
    %v226 = vunpack.c.h.b16 %v107
    %v227 = vunpack.c.l.b16 %v108
    %v228 = vunpack.c.h.b16 %v108
    %v229 = vpack.c.b16 %v223, %v217
    %v230 = vpack.c.b16 %v224, %v218
    %v231 = vpack.c.b16 %v225, %v219
    %v232 = vpack.c.b16 %v226, %v220
    %v233 = vpack.c.b16 %v227, %v221
    %v234 = vpack.c.b16 %v228, %v222
    %v337 = vunpack.c.l.b16 %v109
    %v338 = vunpack.c.h.b16 %v109
    %v339 = vunpack.c.l.b16 %v110
    %v340 = vunpack.c.h.b16 %v110
    %v341 = vunpack.c.l.b16 %v111
    %v342 = vunpack.c.h.b16 %v111
    %v343 = vunpack.c.l.b16 %v112
    %v344 = vunpack.c.h.b16 %v112
    %v345 = vunpack.c.l.b16 %v113
    %v346 = vunpack.c.h.b16 %v113
    %v347 = vunpack.c.l.b16 %v114
    %v348 = vunpack.c.h.b16 %v114
    %v349 = vunpack.c.l.b16 %v115
    %v350 = vunpack.c.h.b16 %v115
    %v351 = vunpack.c.l.b16 %v116
    %v352 = vunpack.c.h.b16 %v116
    %v353 = vunpack.c.l.b16 %v117
    %v354 = vunpack.c.h.b16 %v117
    %v355 = vunpack.c.l.b16 %v118
    %v356 = vunpack.c.h.b16 %v118
    %v357 = vunpack.c.l.b16 %v119
    %v358 = vunpack.c.h.b16 %v119
    %v359 = vunpack.c.l.b16 %v120
    %v360 = vunpack.c.h.b16 %v120
    %v361 = vunpack.c.l.b16 %v121
    %v362 = vunpack.c.h.b16 %v121
    %v363 = vunpack.c.l.b16 %v122
    %v364 = vunpack.c.h.b16 %v122
    %v365 = vunpack.c.l.b16 %v123
    %v366 = vunpack.c.h.b16 %v123
    %v367 = vunpack.c.l.b16 %v124
    %v368 = vunpack.c.h.b16 %v124
    %v369 = vunpack.c.l.b16 %v125
    %v370 = vunpack.c.h.b16 %v125
    %v371 = vunpack.c.l.b16 %v126
    %v372 = vunpack.c.h.b16 %v126
    %v373 = vunpack.c.l.b16 %v127
    %v374 = vunpack.c.h.b16 %v127
    %v375 = vunpack.c.l.b16 %v128
    %v376 = vunpack.c.h.b16 %v128
    %v377 = vunpack.c.l.b16 %v129
    %v378 = vunpack.c.h.b16 %v129
    %v379 = vunpack.c.l.b16 %v130
    %v380 = vunpack.c.h.b16 %v130
    %v381 = vunpack.c.l.b16 %v131
    %v382 = vunpack.c.h.b16 %v131
    %v383 = vunpack.c.l.b16 %v132
    %v384 = vunpack.c.h.b16 %v132
    %v385 = vunpack.c.l.b16 %v133
    %v386 = vunpack.c.h.b16 %v133
    %v387 = vunpack.c.l.b16 %v134
    %v388 = vunpack.c.h.b16 %v134
    %v389 = vunpack.c.l.b16 %v135
    %v390 = vunpack.c.h.b16 %v135
    %v391 = vunpack.c.l.b16 %v136
    %v392 = vunpack.c.h.b16 %v136
    %v393 = vunpack.c.l.b16 %v137
    %v394 = vunpack.c.h.b16 %v137
    %v395 = vunpack.c.l.b16 %v138
    %v396 = vunpack.c.h.b16 %v138
    %v397 = vunpack.c.l.b16 %v139
    %v398 = vunpack.c.h.b16 %v139
    %v399 = vunpack.c.l.b16 %v140
    %v400 = vunpack.c.h.b16 %v140
    %v401 = vunpack.c.l.b16 %v141
    %v402 = vunpack.c.h.b16 %v141
    %v403 = vunpack.c.l.b16 %v142
    %v404 = vunpack.c.h.b16 %v142
    %v405 = vunpack.c.l.b16 %v143
    %v406 = vunpack.c.h.b16 %v143
    %v407 = vunpack.c.l.b16 %v144
    %v408 = vunpack.c.h.b16 %v144
    %v409 = vunpack.c.l.b16 %v145
    %v410 = vunpack.c.h.b16 %v145
    %v411 = vunpack.c.l.b16 %v146
    %v412 = vunpack.c.h.b16 %v146
    %v413 = vunpack.c.l.b16 %v147
    %v414 = vunpack.c.h.b16 %v147
    %v415 = vunpack.c.l.b16 %v148
    %v416 = vunpack.c.h.b16 %v148
    %v417 = vunpack.c.l.b16 %v149
    %v418 = vunpack.c.h.b16 %v149
    %v419 = vunpack.c.l.b16 %v150
    %v420 = vunpack.c.h.b16 %v150
    %v421 = vunpack.c.l.b16 %v151
    %v422 = vunpack.c.h.b16 %v151
    %v423 = vunpack.c.l.b16 %v152
    %v424 = vunpack.c.h.b16 %v152
    %v425 = vunpack.c.l.b16 %v153
    %v426 = vunpack.c.h.b16 %v153
    %v427 = vunpack.c.l.b16 %v154
    %v428 = vunpack.c.h.b16 %v154
    %v429 = vunpack.c.l.b16 %v155
    %v430 = vunpack.c.h.b16 %v155
    %v431 = vunpack.c.l.b16 %v156
    %v432 = vunpack.c.h.b16 %v156
    %v433 = vunpack.c.l.b16 %v157
    %v434 = vunpack.c.h.b16 %v157
    %v435 = vunpack.c.l.b16 %v158
    %v436 = vunpack.c.h.b16 %v158
    %v437 = vunpack.c.l.b16 %v159
    %v438 = vunpack.c.h.b16 %v159
    %v439 = vunpack.c.l.b16 %v160
    %v440 = vunpack.c.h.b16 %v160
    %v441 = vunpack.c.l.b16 %v161
    %v442 = vunpack.c.h.b16 %v161
    %v443 = vunpack.c.l.b16 %v162
    %v444 = vunpack.c.h.b16 %v162
    %v445 = vunpack.c.l.b16 %v163
    %v446 = vunpack.c.h.b16 %v163
    %v447 = vunpack.c.l.b16 %v164
    %v448 = vunpack.c.h.b16 %v164
    %v449 = vunpack.c.l.b16 %v165
    %v450 = vunpack.c.h.b16 %v165
    %v451 = vunpack.c.l.b16 %v166
    %v452 = vunpack.c.h.b16 %v166
    %v453 = vunpack.c.l.b16 %v167
    %v454 = vunpack.c.h.b16 %v167
    %v455 = vunpack.c.l.b16 %v168
    %v456 = vunpack.c.h.b16 %v168
    %v457 = vunpack.c.l.b16 %v169
    %v458 = vunpack.c.h.b16 %v169
    %v459 = vunpack.c.l.b16 %v170
    %v460 = vunpack.c.h.b16 %v170
    %v461 = vunpack.c.l.b16 %v171
    %v462 = vunpack.c.h.b16 %v171
    %v463 = vunpack.c.l.b16 %v172
    %v464 = vunpack.c.h.b16 %v172
    %v465 = vunpack.c.l.b16 %v173
    %v466 = vunpack.c.h.b16 %v173
    %v467 = vunpack.c.l.b16 %v174
    %v468 = vunpack.c.h.b16 %v174
    %v469 = vunpack.c.l.b16 %v175
    %v470 = vunpack.c.h.b16 %v175
    %v471 = vunpack.c.l.b16 %v176
    %v472 = vunpack.c.h.b16 %v176
    %v473 = vunpack.c.l.b16 %v177
    %v474 = vunpack.c.h.b16 %v177
    %v475 = vunpack.c.l.b16 %v178
    %v476 = vunpack.c.h.b16 %v178
    %v477 = vunpack.c.l.b16 %v179
    %v478 = vunpack.c.h.b16 %v179
    %v479 = vunpack.c.l.b16 %v180
    %v480 = vunpack.c.h.b16 %v180
    %v481 = vunpack.c.l.b16 %v181
    %v482 = vunpack.c.h.b16 %v181
    %v483 = vunpack.c.l.b16 %v182
    %v484 = vunpack.c.h.b16 %v182
    %v485 = vunpack.c.l.b16 %v183
    %v486 = vunpack.c.h.b16 %v183
    %v487 = vunpack.c.l.b16 %v184
    %v488 = vunpack.c.h.b16 %v184
    %v489 = vunpack.c.l.b16 %v185
    %v490 = vunpack.c.h.b16 %v185
    %v491 = vunpack.c.l.b16 %v186
    %v492 = vunpack.c.h.b16 %v186
    %v493 = vunpack.c.l.b16 %v187
    %v494 = vunpack.c.h.b16 %v187
    %v495 = vunpack.c.l.b16 %v188
    %v496 = vunpack.c.h.b16 %v188
    %v497 = vunpack.c.l.b16 %v189
    %v498 = vunpack.c.h.b16 %v189
    %v499 = vunpack.c.l.b16 %v190
    %v500 = vunpack.c.h.b16 %v190
    %v501 = vunpack.c.l.b16 %v191
    %v502 = vunpack.c.h.b16 %v191
    %v503 = vunpack.c.l.b16 %v192
    %v504 = vunpack.c.h.b16 %v192
    %v505 = vunpack.c.l.b16 %v193
    %v506 = vunpack.c.h.b16 %v193
    %v507 = vunpack.c.l.b16 %v194
    %v508 = vunpack.c.h.b16 %v194
    %v509 = vunpack.c.l.b16 %v195
    %v510 = vunpack.c.h.b16 %v195
    %v511 = vunpack.c.l.b16 %v196
    %v512 = vunpack.c.h.b16 %v196
    %v513 = vunpack.c.l.b16 %v197
    %v514 = vunpack.c.h.b16 %v197
    %v515 = vunpack.c.l.b16 %v198
    %v516 = vunpack.c.h.b16 %v198
    %v517 = vunpack.c.l.b16 %v199
    %v518 = vunpack.c.h.b16 %v199
    %v519 = vunpack.c.l.b16 %v200
    %v520 = vunpack.c.h.b16 %v200
    %v521 = vunpack.c.l.b16 %v201
    %v522 = vunpack.c.h.b16 %v201
    %v523 = vunpack.c.l.b16 %v202
    %v524 = vunpack.c.h.b16 %v202
    %v525 = vunpack.c.l.b16 %v203
    %v526 = vunpack.c.h.b16 %v203
    %v527 = vunpack.c.l.b16 %v204
    %v528 = vunpack.c.h.b16 %v204
    %v529 = vpack.c.b16 %v339, %v337
    %v530 = vpack.c.b16 %v340, %v338
    %v531 = vpack.c.b16 %v343, %v341
    %v532 = vpack.c.b16 %v344, %v342
    %v533 = vpack.c.b16 %v347, %v345
    %v534 = vpack.c.b16 %v348, %v346
    %v535 = vpack.c.b16 %v351, %v349
    %v536 = vpack.c.b16 %v352, %v350
    %v537 = vpack.c.b16 %v355, %v353
    %v538 = vpack.c.b16 %v356, %v354
    %v539 = vpack.c.b16 %v359, %v357
    %v540 = vpack.c.b16 %v360, %v358
    %v541 = vpack.c.b16 %v363, %v361
    %v542 = vpack.c.b16 %v364, %v362
    %v543 = vpack.c.b16 %v367, %v365
    %v544 = vpack.c.b16 %v368, %v366
    %v545 = vpack.c.b16 %v371, %v369
    %v546 = vpack.c.b16 %v372, %v370
    %v547 = vpack.c.b16 %v375, %v373
    %v548 = vpack.c.b16 %v376, %v374
    %v549 = vpack.c.b16 %v379, %v377
    %v550 = vpack.c.b16 %v380, %v378
    %v551 = vpack.c.b16 %v383, %v381
    %v552 = vpack.c.b16 %v384, %v382
    %v553 = vpack.c.b16 %v387, %v385
    %v554 = vpack.c.b16 %v388, %v386
    %v555 = vpack.c.b16 %v391, %v389
    %v556 = vpack.c.b16 %v392, %v390
    %v557 = vpack.c.b16 %v395, %v393
    %v558 = vpack.c.b16 %v396, %v394
    %v559 = vpack.c.b16 %v399, %v397
    %v560 = vpack.c.b16 %v400, %v398
    %v561 = vpack.c.b16 %v403, %v401
    %v562 = vpack.c.b16 %v404, %v402
    %v563 = vpack.c.b16 %v407, %v405
    %v564 = vpack.c.b16 %v408, %v406
    %v565 = vpack.c.b16 %v411, %v409
    %v566 = vpack.c.b16 %v412, %v410
    %v567 = vpack.c.b16 %v415, %v413
    %v568 = vpack.c.b16 %v416, %v414
    %v569 = vpack.c.b16 %v419, %v417
    %v570 = vpack.c.b16 %v420, %v418
    %v571 = vpack.c.b16 %v423, %v421
    %v572 = vpack.c.b16 %v424, %v422
    %v573 = vpack.c.b16 %v427, %v425
    %v574 = vpack.c.b16 %v428, %v426
    %v575 = vpack.c.b16 %v431, %v429
    %v576 = vpack.c.b16 %v432, %v430
    %v577 = vpack.c.b16 %v435, %v433
    %v578 = vpack.c.b16 %v436, %v434
    %v579 = vpack.c.b16 %v439, %v437
    %v580 = vpack.c.b16 %v440, %v438
    %v581 = vpack.c.b16 %v443, %v441
    %v582 = vpack.c.b16 %v444, %v442
    %v583 = vpack.c.b16 %v447, %v445
    %v584 = vpack.c.b16 %v448, %v446
    %v585 = vpack.c.b16 %v451, %v449
    %v586 = vpack.c.b16 %v452, %v450
    %v587 = vpack.c.b16 %v455, %v453
    %v588 = vpack.c.b16 %v456, %v454
    %v589 = vpack.c.b16 %v459, %v457
    %v590 = vpack.c.b16 %v460, %v458
    %v591 = vpack.c.b16 %v463, %v461
    %v592 = vpack.c.b16 %v464, %v462
    %v593 = vpack.c.b16 %v467, %v465
    %v594 = vpack.c.b16 %v468, %v466
    %v595 = vpack.c.b16 %v471, %v469
    %v596 = vpack.c.b16 %v472, %v470
    %v597 = vpack.c.b16 %v475, %v473
    %v598 = vpack.c.b16 %v476, %v474
    %v599 = vpack.c.b16 %v479, %v477
    %v600 = vpack.c.b16 %v480, %v478
    %v601 = vpack.c.b16 %v483, %v481
    %v602 = vpack.c.b16 %v484, %v482
    %v603 = vpack.c.b16 %v487, %v485
    %v604 = vpack.c.b16 %v488, %v486
    %v605 = vpack.c.b16 %v491, %v489
    %v606 = vpack.c.b16 %v492, %v490
    %v607 = vpack.c.b16 %v495, %v493
    %v608 = vpack.c.b16 %v496, %v494
    %v609 = vpack.c.b16 %v499, %v497
    %v610 = vpack.c.b16 %v500, %v498
    %v611 = vpack.c.b16 %v503, %v501
    %v612 = vpack.c.b16 %v504, %v502
    %v613 = vpack.c.b16 %v507, %v505
    %v614 = vpack.c.b16 %v508, %v506
    %v615 = vpack.c.b16 %v511, %v509
    %v616 = vpack.c.b16 %v512, %v510
    %v617 = vpack.c.b16 %v515, %v513
    %v618 = vpack.c.b16 %v516, %v514
    %v619 = vpack.c.b16 %v519, %v517
    %v620 = vpack.c.b16 %v520, %v518
    %v621 = vpack.c.b16 %v523, %v521
    %v622 = vpack.c.b16 %v524, %v522
    %v623 = vpack.c.b16 %v527, %v525
    %v624 = vpack.c.b16 %v528, %v526
    %721 = vmatpush.bf16.msra.mxu0 %v543
    %722 = vmatpush.bf16.msra.mxu0 %v541
    %723 = vmatpush.bf16.msra.mxu0 %v539
    %724 = vmatpush.bf16.msra.mxu0 %v537
    %725 = vmatpush.bf16.msra.mxu0 %v535
    %726 = vmatpush.bf16.msra.mxu0 %v533
    %727 = vmatpush.bf16.msra.mxu0 %v531
    %728 = vmatpush.bf16.msra.mxu0 %v529
    %729 = vmatmul.bf16.gmra.mxu0 %v229
    %v730 = vpop.f32.mrf.mxu0
    %v731 = vadd.f32 %v207, %v730
    %v732 = vpop.f32.mrf.mxu0
    %v733 = vadd.f32 %v207, %v732
    %734 = vdwg.mxu0
    %735 = vmatpush.bf16.msra.mxu0 %v559
    %736 = vmatpush.bf16.msra.mxu0 %v557
    %737 = vmatpush.bf16.msra.mxu0 %v555
    %738 = vmatpush.bf16.msra.mxu0 %v553
    %739 = vmatpush.bf16.msra.mxu0 %v551
    %740 = vmatpush.bf16.msra.mxu0 %v549
    %741 = vmatpush.bf16.msra.mxu0 %v547
    %742 = vmatpush.bf16.msra.mxu0 %v545
    %743 = vmatmul.bf16.gmra.mxu0 %v230
    %v744 = vpop.f32.mrf.mxu0
    %v745 = vadd.f32 %v731, %v744
    %v746 = vpop.f32.mrf.mxu0
    %v747 = vadd.f32 %v733, %v746
    %748 = vdwg.mxu0
    %749 = vmatpush.bf16.msra.mxu0 %v575
    %750 = vmatpush.bf16.msra.mxu0 %v573
    %751 = vmatpush.bf16.msra.mxu0 %v571
    %752 = vmatpush.bf16.msra.mxu0 %v569
    %753 = vmatpush.bf16.msra.mxu0 %v567
    %754 = vmatpush.bf16.msra.mxu0 %v565
    %755 = vmatpush.bf16.msra.mxu0 %v563
    %756 = vmatpush.bf16.msra.mxu0 %v561
    %757 = vmatmul.bf16.gmra.mxu0 %v231
    %v758 = vpop.f32.mrf.mxu0
    %v759 = vadd.f32 %v745, %v758
    %v760 = vpop.f32.mrf.mxu0
    %v761 = vadd.f32 %v747, %v760
    %762 = vdwg.mxu0
    %763 = vmatpush.bf16.msra.mxu0 %v591
    %764 = vmatpush.bf16.msra.mxu0 %v589
    %765 = vmatpush.bf16.msra.mxu0 %v587
    %766 = vmatpush.bf16.msra.mxu0 %v585
    %767 = vmatpush.bf16.msra.mxu0 %v583
    %768 = vmatpush.bf16.msra.mxu0 %v581
    %769 = vmatpush.bf16.msra.mxu0 %v579
    %770 = vmatpush.bf16.msra.mxu0 %v577
    %771 = vmatmul.bf16.gmra.mxu0 %v232
    %v772 = vpop.f32.mrf.mxu0
    %v773 = vadd.f32 %v759, %v772
    %v774 = vpop.f32.mrf.mxu0
    %v775 = vadd.f32 %v761, %v774
    %776 = vdwg.mxu0
    %777 = vmatpush.bf16.msra.mxu0 %v607
    %778 = vmatpush.bf16.msra.mxu0 %v605
    %779 = vmatpush.bf16.msra.mxu0 %v603
    %780 = vmatpush.bf16.msra.mxu0 %v601
    %781 = vmatpush.bf16.msra.mxu0 %v599
    %782 = vmatpush.bf16.msra.mxu0 %v597
    %783 = vmatpush.bf16.msra.mxu0 %v595
    %784 = vmatpush.bf16.msra.mxu0 %v593
    %785 = vmatmul.bf16.gmra.mxu0 %v233
    %v786 = vpop.f32.mrf.mxu0
    %v787 = vadd.f32 %v773, %v786
    %v788 = vpop.f32.mrf.mxu0
    %v789 = vadd.f32 %v775, %v788
    %790 = vdwg.mxu0
    %791 = vmatpush.bf16.msra.mxu0 %v623
    %792 = vmatpush.bf16.msra.mxu0 %v621
    %793 = vmatpush.bf16.msra.mxu0 %v619
    %794 = vmatpush.bf16.msra.mxu0 %v617
    %795 = vmatpush.bf16.msra.mxu0 %v615
    %796 = vmatpush.bf16.msra.mxu0 %v613
    %797 = vmatpush.bf16.msra.mxu0 %v611
    %798 = vmatpush.bf16.msra.mxu0 %v609
    %799 = vmatmul.bf16.gmra.mxu0 %v234
    %v800 = vpop.f32.mrf.mxu0
    %v801 = vadd.f32 %v787, %v800
    %v802 = vpop.f32.mrf.mxu0
    %v803 = vadd.f32 %v789, %v802
    %804 = vdwg.mxu0
    %805 = vmatpush.bf16.msra.mxu0 %v544
    %806 = vmatpush.bf16.msra.mxu0 %v542
    %807 = vmatpush.bf16.msra.mxu0 %v540
    %808 = vmatpush.bf16.msra.mxu0 %v538
    %809 = vmatpush.bf16.msra.mxu0 %v536
    %810 = vmatpush.bf16.msra.mxu0 %v534
    %811 = vmatpush.bf16.msra.mxu0 %v532
    %812 = vmatpush.bf16.msra.mxu0 %v530
    %813 = vmatmul.bf16.gmra.mxu0 %v229
    %v814 = vpop.f32.mrf.mxu0
    %v815 = vadd.f32 %v208, %v814
    %v816 = vpop.f32.mrf.mxu0
    %v817 = vadd.f32 %v208, %v816
    %818 = vdwg.mxu0
    %819 = vmatpush.bf16.msra.mxu0 %v560
    %820 = vmatpush.bf16.msra.mxu0 %v558
    %821 = vmatpush.bf16.msra.mxu0 %v556
    %822 = vmatpush.bf16.msra.mxu0 %v554
    %823 = vmatpush.bf16.msra.mxu0 %v552
    %824 = vmatpush.bf16.msra.mxu0 %v550
    %825 = vmatpush.bf16.msra.mxu0 %v548
    %826 = vmatpush.bf16.msra.mxu0 %v546
    %827 = vmatmul.bf16.gmra.mxu0 %v230
    %v828 = vpop.f32.mrf.mxu0
    %v829 = vadd.f32 %v815, %v828
    %v830 = vpop.f32.mrf.mxu0
    %v831 = vadd.f32 %v817, %v830
    %832 = vdwg.mxu0
    %833 = vmatpush.bf16.msra.mxu0 %v576
    %834 = vmatpush.bf16.msra.mxu0 %v574
    %835 = vmatpush.bf16.msra.mxu0 %v572
    %836 = vmatpush.bf16.msra.mxu0 %v570
    %837 = vmatpush.bf16.msra.mxu0 %v568
    %838 = vmatpush.bf16.msra.mxu0 %v566
    %839 = vmatpush.bf16.msra.mxu0 %v564
    %840 = vmatpush.bf16.msra.mxu0 %v562
    %841 = vmatmul.bf16.gmra.mxu0 %v231
    %v842 = vpop.f32.mrf.mxu0
    %v843 = vadd.f32 %v829, %v842
    %v844 = vpop.f32.mrf.mxu0
    %v845 = vadd.f32 %v831, %v844
    %846 = vdwg.mxu0
    %847 = vmatpush.bf16.msra.mxu0 %v592
    %848 = vmatpush.bf16.msra.mxu0 %v590
    %849 = vmatpush.bf16.msra.mxu0 %v588
    %850 = vmatpush.bf16.msra.mxu0 %v586
    %851 = vmatpush.bf16.msra.mxu0 %v584
    %852 = vmatpush.bf16.msra.mxu0 %v582
    %853 = vmatpush.bf16.msra.mxu0 %v580
    %854 = vmatpush.bf16.msra.mxu0 %v578
    %855 = vmatmul.bf16.gmra.mxu0 %v232
    %v856 = vpop.f32.mrf.mxu0
    %v857 = vadd.f32 %v843, %v856
    %v858 = vpop.f32.mrf.mxu0
    %v859 = vadd.f32 %v845, %v858
    %860 = vdwg.mxu0
    %861 = vmatpush.bf16.msra.mxu0 %v608
    %862 = vmatpush.bf16.msra.mxu0 %v606
    %863 = vmatpush.bf16.msra.mxu0 %v604
    %864 = vmatpush.bf16.msra.mxu0 %v602
    %865 = vmatpush.bf16.msra.mxu0 %v600
    %866 = vmatpush.bf16.msra.mxu0 %v598
    %867 = vmatpush.bf16.msra.mxu0 %v596
    %868 = vmatpush.bf16.msra.mxu0 %v594
    %869 = vmatmul.bf16.gmra.mxu0 %v233
    %v870 = vpop.f32.mrf.mxu0
    %v871 = vadd.f32 %v857, %v870
    %v872 = vpop.f32.mrf.mxu0
    %v873 = vadd.f32 %v859, %v872
    %874 = vdwg.mxu0
    %875 = vmatpush.bf16.msra.mxu0 %v624
    %876 = vmatpush.bf16.msra.mxu0 %v622
    %877 = vmatpush.bf16.msra.mxu0 %v620
    %878 = vmatpush.bf16.msra.mxu0 %v618
    %879 = vmatpush.bf16.msra.mxu0 %v616
    %880 = vmatpush.bf16.msra.mxu0 %v614
    %881 = vmatpush.bf16.msra.mxu0 %v612
    %882 = vmatpush.bf16.msra.mxu0 %v610
    %883 = vmatmul.bf16.gmra.mxu0 %v234
    %v884 = vpop.f32.mrf.mxu0
    %v885 = vadd.f32 %v871, %v884
    %v886 = vpop.f32.mrf.mxu0
    %v887 = vadd.f32 %v873, %v886
    %888 = vdwg.mxu0
    %v889 = vmax.f32 %v801, 0.0
    %v890 = vmax.f32 %v885, 0.0
    %v891 = vmax.f32 %v803, 0.0
    %v892 = vmax.f32 %v887, 0.0
    %v893 = vpack.c.bf16 %v891, %v889
    %v894 = vpack.c.bf16 %v892, %v890
    %v895 = vld [vmem:[#allocation8] sm:$0xff]
    %v896 = vld [vmem:[#allocation8 + $0x8] sm:$0xff]
    %v897 = vld [vmem:[#allocation8 + $0x10] sm:$0xff]
    %v898 = vld [vmem:[#allocation8 + $0x18] sm:$0xff]
    %v899 = vld [vmem:[#allocation8 + $0x20] sm:$0xff]
    %v900 = vld [vmem:[#allocation8 + $0x28] sm:$0xff]
    %v901 = vld [vmem:[#allocation8 + $0x30] sm:$0xff]
    %v902 = vld [vmem:[#allocation8 + $0x38] sm:$0xff]
    %v903 = vld [vmem:[#allocation8 + $0x40] sm:$0xff]
    %v904 = vld [vmem:[#allocation8 + $0x48] sm:$0xff]
    %v905 = vld [vmem:[#allocation8 + $0x50] sm:$0xff]
    %v906 = vld [vmem:[#allocation8 + $0x58] sm:$0xff]
    %v907 = vld [vmem:[#allocation8 + $0x60] sm:$0xff]
    %v908 = vld [vmem:[#allocation8 + $0x68] sm:$0xff]
    %v909 = vld [vmem:[#allocation8 + $0x70] sm:$0xff]
    %v910 = vld [vmem:[#allocation8 + $0x78] sm:$0xff]
    %v911 = vld [vmem:[#allocation8 + $0x80] sm:$0xff]
    %v912 = vld [vmem:[#allocation8 + $0x88] sm:$0xff]
    %v913 = vld [vmem:[#allocation8 + $0x90] sm:$0xff]
    %v914 = vld [vmem:[#allocation8 + $0x98] sm:$0xff]
    %v915 = vld [vmem:[#allocation8 + $0xa0] sm:$0xff]
    %v916 = vld [vmem:[#allocation8 + $0xa8] sm:$0xff]
    %v917 = vld [vmem:[#allocation8 + $0xb0] sm:$0xff]
    %v918 = vld [vmem:[#allocation8 + $0xb8] sm:$0xff]
    %v919 = vld [vmem:[#allocation8 + $0xc0] sm:$0xff]
    %v920 = vld [vmem:[#allocation8 + $0xc8] sm:$0xff]
    %v921 = vld [vmem:[#allocation8 + $0xd0] sm:$0xff]
    %v922 = vld [vmem:[#allocation8 + $0xd8] sm:$0xff]
    %v923 = vld [vmem:[#allocation8 + $0xe0] sm:$0xff]
    %v924 = vld [vmem:[#allocation8 + $0xe8] sm:$0xff]
    %v925 = vld [vmem:[#allocation8 + $0xf0] sm:$0xff]
    %v926 = vld [vmem:[#allocation8 + $0xf8] sm:$0xff]
    %v927 = vld [vmem:[%s4] sm:$0x3]
    %v929 = vperm.slane %v927, 0
    %v930 = vperm.slane %v927, 1
    %v965 = vunpack.c.l.b16 %v895
    %v966 = vunpack.c.h.b16 %v895
    %v967 = vunpack.c.l.b16 %v896
    %v968 = vunpack.c.h.b16 %v896
    %v969 = vunpack.c.l.b16 %v897
    %v970 = vunpack.c.h.b16 %v897
    %v971 = vunpack.c.l.b16 %v898
    %v972 = vunpack.c.h.b16 %v898
    %v973 = vunpack.c.l.b16 %v899
    %v974 = vunpack.c.h.b16 %v899
    %v975 = vunpack.c.l.b16 %v900
    %v976 = vunpack.c.h.b16 %v900
    %v977 = vunpack.c.l.b16 %v901
    %v978 = vunpack.c.h.b16 %v901
    %v979 = vunpack.c.l.b16 %v902
    %v980 = vunpack.c.h.b16 %v902
    %v981 = vunpack.c.l.b16 %v903
    %v982 = vunpack.c.h.b16 %v903
    %v983 = vunpack.c.l.b16 %v904
    %v984 = vunpack.c.h.b16 %v904
    %v985 = vunpack.c.l.b16 %v905
    %v986 = vunpack.c.h.b16 %v905
    %v987 = vunpack.c.l.b16 %v906
    %v988 = vunpack.c.h.b16 %v906
    %v989 = vunpack.c.l.b16 %v907
    %v990 = vunpack.c.h.b16 %v907
    %v991 = vunpack.c.l.b16 %v908
    %v992 = vunpack.c.h.b16 %v908
    %v993 = vunpack.c.l.b16 %v909
    %v994 = vunpack.c.h.b16 %v909
    %v995 = vunpack.c.l.b16 %v910
    %v996 = vunpack.c.h.b16 %v910
    %v997 = vunpack.c.l.b16 %v911
    %v998 = vunpack.c.h.b16 %v911
    %v999 = vunpack.c.l.b16 %v912
    %v1000 = vunpack.c.h.b16 %v912
    %v1001 = vunpack.c.l.b16 %v913
    %v1002 = vunpack.c.h.b16 %v913
    %v1003 = vunpack.c.l.b16 %v914
    %v1004 = vunpack.c.h.b16 %v914
    %v1005 = vunpack.c.l.b16 %v915
    %v1006 = vunpack.c.h.b16 %v915
    %v1007 = vunpack.c.l.b16 %v916
    %v1008 = vunpack.c.h.b16 %v916
    %v1009 = vunpack.c.l.b16 %v917
    %v1010 = vunpack.c.h.b16 %v917
    %v1011 = vunpack.c.l.b16 %v918
    %v1012 = vunpack.c.h.b16 %v918
    %v1013 = vunpack.c.l.b16 %v919
    %v1014 = vunpack.c.h.b16 %v919
    %v1015 = vunpack.c.l.b16 %v920
    %v1016 = vunpack.c.h.b16 %v920
    %v1017 = vunpack.c.l.b16 %v921
    %v1018 = vunpack.c.h.b16 %v921
    %v1019 = vunpack.c.l.b16 %v922
    %v1020 = vunpack.c.h.b16 %v922
    %v1021 = vunpack.c.l.b16 %v923
    %v1022 = vunpack.c.h.b16 %v923
    %v1023 = vunpack.c.l.b16 %v924
    %v1024 = vunpack.c.h.b16 %v924
    %v1025 = vunpack.c.l.b16 %v925
    %v1026 = vunpack.c.h.b16 %v925
    %v1027 = vunpack.c.l.b16 %v926
    %v1028 = vunpack.c.h.b16 %v926
    %v1029 = vpack.c.b16 %v967, %v965
    %v1030 = vpack.c.b16 %v968, %v966
    %v1031 = vpack.c.b16 %v971, %v969
    %v1032 = vpack.c.b16 %v972, %v970
    %v1033 = vpack.c.b16 %v975, %v973
    %v1034 = vpack.c.b16 %v976, %v974
    %v1035 = vpack.c.b16 %v979, %v977
    %v1036 = vpack.c.b16 %v980, %v978
    %v1037 = vpack.c.b16 %v983, %v981
    %v1038 = vpack.c.b16 %v984, %v982
    %v1039 = vpack.c.b16 %v987, %v985
    %v1040 = vpack.c.b16 %v988, %v986
    %v1041 = vpack.c.b16 %v991, %v989
    %v1042 = vpack.c.b16 %v992, %v990
    %v1043 = vpack.c.b16 %v995, %v993
    %v1044 = vpack.c.b16 %v996, %v994
    %v1045 = vpack.c.b16 %v999, %v997
    %v1046 = vpack.c.b16 %v1000, %v998
    %v1047 = vpack.c.b16 %v1003, %v1001
    %v1048 = vpack.c.b16 %v1004, %v1002
    %v1049 = vpack.c.b16 %v1007, %v1005
    %v1050 = vpack.c.b16 %v1008, %v1006
    %v1051 = vpack.c.b16 %v1011, %v1009
    %v1052 = vpack.c.b16 %v1012, %v1010
    %v1053 = vpack.c.b16 %v1015, %v1013
    %v1054 = vpack.c.b16 %v1016, %v1014
    %v1055 = vpack.c.b16 %v1019, %v1017
    %v1056 = vpack.c.b16 %v1020, %v1018
    %v1057 = vpack.c.b16 %v1023, %v1021
    %v1058 = vpack.c.b16 %v1024, %v1022
    %v1059 = vpack.c.b16 %v1027, %v1025
    %v1060 = vpack.c.b16 %v1028, %v1026
    %1093 = vmatpush.bf16.msra.mxu0 %v1043
    %1094 = vmatpush.bf16.msra.mxu0 %v1041
    %1095 = vmatpush.bf16.msra.mxu0 %v1039
    %1096 = vmatpush.bf16.msra.mxu0 %v1037
    %1097 = vmatpush.bf16.msra.mxu0 %v1035
    %1098 = vmatpush.bf16.msra.mxu0 %v1033
    %1099 = vmatpush.bf16.msra.mxu0 %v1031
    %1100 = vmatpush.bf16.msra.mxu0 %v1029
    %1101 = vmatmul.bf16.gmra.mxu0 %v893
    %v1102 = vpop.f32.mrf.mxu0
    %v1103 = vadd.f32 %v929, %v1102
    %v1104 = vpop.f32.mrf.mxu0
    %v1105 = vadd.f32 %v929, %v1104
    %1106 = vdwg.mxu0
    %1107 = vmatpush.bf16.msra.mxu0 %v1059
    %1108 = vmatpush.bf16.msra.mxu0 %v1057
    %1109 = vmatpush.bf16.msra.mxu0 %v1055
    %1110 = vmatpush.bf16.msra.mxu0 %v1053
    %1111 = vmatpush.bf16.msra.mxu0 %v1051
    %1112 = vmatpush.bf16.msra.mxu0 %v1049
    %1113 = vmatpush.bf16.msra.mxu0 %v1047
    %1114 = vmatpush.bf16.msra.mxu0 %v1045
    %1115 = vmatmul.bf16.gmra.mxu0 %v894
    %v1116 = vpop.f32.mrf.mxu0
    %v1117 = vadd.f32 %v1103, %v1116
    %v1118 = vpop.f32.mrf.mxu0
    %v1119 = vadd.f32 %v1105, %v1118
    %1120 = vdwg.mxu0
    %1121 = vmatpush.bf16.msra.mxu0 %v1044
    %1122 = vmatpush.bf16.msra.mxu0 %v1042
    %1123 = vmatpush.bf16.msra.mxu0 %v1040
    %1124 = vmatpush.bf16.msra.mxu0 %v1038
    %1125 = vmatpush.bf16.msra.mxu0 %v1036
    %1126 = vmatpush.bf16.msra.mxu0 %v1034
    %1127 = vmatpush.bf16.msra.mxu0 %v1032
    %1128 = vmatpush.bf16.msra.mxu0 %v1030
    %1129 = vmatmul.bf16.gmra.mxu0 %v893
    %v1130 = vpop.f32.mrf.mxu0
    %v1131 = vadd.f32 %v930, %v1130
    %v1132 = vpop.f32.mrf.mxu0
    %v1133 = vadd.f32 %v930, %v1132
    %1134 = vdwg.mxu0
    %1135 = vmatpush.bf16.msra.mxu0 %v1060
    %1136 = vmatpush.bf16.msra.mxu0 %v1058
    %1137 = vmatpush.bf16.msra.mxu0 %v1056
    %1138 = vmatpush.bf16.msra.mxu0 %v1054
    %1139 = vmatpush.bf16.msra.mxu0 %v1052
    %1140 = vmatpush.bf16.msra.mxu0 %v1050
    %1141 = vmatpush.bf16.msra.mxu0 %v1048
    %1142 = vmatpush.bf16.msra.mxu0 %v1046
    %1143 = vmatmul.bf16.gmra.mxu0 %v894
    %v1144 = vpop.f32.mrf.mxu0
    %v1145 = vadd.f32 %v1131, %v1144
    %v1146 = vpop.f32.mrf.mxu0
    %v1147 = vadd.f32 %v1133, %v1146
    %1148 = vdwg.mxu0
    %v1149 = vmax.f32 %v1117, 0.0
    %v1150 = vmax.f32 %v1145, 0.0
    %v1151 = vmax.f32 %v1119, 0.0
    %v1152 = vmax.f32 %v1147, 0.0
    %v1153 = vpack.c.bf16 %v1151, %v1149
    %v1154 = vpack.c.bf16 %v1152, %v1150
    %v1155 = vld [vmem:[#allocation10] sm:$0xf]
    %v1156 = vld [vmem:[#allocation10 + $0x4] sm:$0xf]
    %v1157 = vld [vmem:[#allocation10 + $0x8] sm:$0xf]
    %v1158 = vld [vmem:[#allocation10 + $0xc] sm:$0xf]
    %v1159 = vld [vmem:[#allocation10 + $0x10] sm:$0xf]
    %v1160 = vld [vmem:[#allocation10 + $0x14] sm:$0xf]
    %v1161 = vld [vmem:[#allocation10 + $0x18] sm:$0xf]
    %v1162 = vld [vmem:[#allocation10 + $0x1c] sm:$0xf]
    %v1163 = vld [vmem:[#allocation10 + $0x20] sm:$0xf]
    %v1164 = vld [vmem:[#allocation10 + $0x24] sm:$0xf]
    %v1165 = vld [vmem:[#allocation10 + $0x28] sm:$0xf]
    %v1166 = vld [vmem:[#allocation10 + $0x2c] sm:$0xf]
    %v1167 = vld [vmem:[#allocation10 + $0x30] sm:$0xf]
    %v1168 = vld [vmem:[#allocation10 + $0x34] sm:$0xf]
    %v1169 = vld [vmem:[#allocation10 + $0x38] sm:$0xf]
    %v1170 = vld [vmem:[#allocation10 + $0x3c] sm:$0xf]
    %v1171 = vld [vmem:[#allocation10 + $0x40] sm:$0xf]
    %v1172 = vld [vmem:[#allocation10 + $0x44] sm:$0xf]
    %v1173 = vld [vmem:[#allocation10 + $0x48] sm:$0xf]
    %v1174 = vld [vmem:[#allocation10 + $0x4c] sm:$0xf]
    %v1175 = vld [vmem:[#allocation10 + $0x50] sm:$0xf]
    %v1176 = vld [vmem:[#allocation10 + $0x54] sm:$0xf]
    %v1177 = vld [vmem:[#allocation10 + $0x58] sm:$0xf]
    %v1178 = vld [vmem:[#allocation10 + $0x5c] sm:$0xf]
    %v1179 = vld [vmem:[#allocation10 + $0x60] sm:$0xf]
    %v1180 = vld [vmem:[#allocation10 + $0x64] sm:$0xf]
    %v1181 = vld [vmem:[#allocation10 + $0x68] sm:$0xf]
    %v1182 = vld [vmem:[#allocation10 + $0x6c] sm:$0xf]
    %v1183 = vld [vmem:[#allocation10 + $0x70] sm:$0xf]
    %v1184 = vld [vmem:[#allocation10 + $0x74] sm:$0xf]
    %v1185 = vld [vmem:[#allocation10 + $0x78] sm:$0xf]
    %v1186 = vld [vmem:[#allocation10 + $0x7c] sm:$0xf]
    %v1187 = vld [vmem:[%s6] sm:$0x1]
    %v1189 = vperm.slane %v1187, 0
    %v1223 = vunpack.c.l.b16 %v1155
    %v1224 = vunpack.c.l.b16 %v1156
    %v1225 = vunpack.c.l.b16 %v1157
    %v1226 = vunpack.c.l.b16 %v1158
    %v1227 = vunpack.c.l.b16 %v1159
    %v1228 = vunpack.c.l.b16 %v1160
    %v1229 = vunpack.c.l.b16 %v1161
    %v1230 = vunpack.c.l.b16 %v1162
    %v1231 = vunpack.c.l.b16 %v1163
    %v1232 = vunpack.c.l.b16 %v1164
    %v1233 = vunpack.c.l.b16 %v1165
    %v1234 = vunpack.c.l.b16 %v1166
    %v1235 = vunpack.c.l.b16 %v1167
    %v1236 = vunpack.c.l.b16 %v1168
    %v1237 = vunpack.c.l.b16 %v1169
    %v1238 = vunpack.c.l.b16 %v1170
    %v1239 = vunpack.c.l.b16 %v1171
    %v1240 = vunpack.c.l.b16 %v1172
    %v1241 = vunpack.c.l.b16 %v1173
    %v1242 = vunpack.c.l.b16 %v1174
    %v1243 = vunpack.c.l.b16 %v1175
    %v1244 = vunpack.c.l.b16 %v1176
    %v1245 = vunpack.c.l.b16 %v1177
    %v1246 = vunpack.c.l.b16 %v1178
    %v1247 = vunpack.c.l.b16 %v1179
    %v1248 = vunpack.c.l.b16 %v1180
    %v1249 = vunpack.c.l.b16 %v1181
    %v1250 = vunpack.c.l.b16 %v1182
    %v1251 = vunpack.c.l.b16 %v1183
    %v1252 = vunpack.c.l.b16 %v1184
    %v1253 = vunpack.c.l.b16 %v1185
    %v1254 = vunpack.c.l.b16 %v1186
    %v1255 = vpack.c.b16 %v1224, %v1223
    %v1256 = vpack.c.b16 %v1226, %v1225
    %v1257 = vpack.c.b16 %v1228, %v1227
    %v1258 = vpack.c.b16 %v1230, %v1229
    %v1259 = vpack.c.b16 %v1232, %v1231
    %v1260 = vpack.c.b16 %v1234, %v1233
    %v1261 = vpack.c.b16 %v1236, %v1235
    %v1262 = vpack.c.b16 %v1238, %v1237
    %v1263 = vpack.c.b16 %v1240, %v1239
    %v1264 = vpack.c.b16 %v1242, %v1241
    %v1265 = vpack.c.b16 %v1244, %v1243
    %v1266 = vpack.c.b16 %v1246, %v1245
    %v1267 = vpack.c.b16 %v1248, %v1247
    %v1268 = vpack.c.b16 %v1250, %v1249
    %v1269 = vpack.c.b16 %v1252, %v1251
    %v1270 = vpack.c.b16 %v1254, %v1253
    %1287 = vmatpush.bf16.msra.mxu0 %v1262
    %1288 = vmatpush.bf16.msra.mxu0 %v1261
    %1289 = vmatpush.bf16.msra.mxu0 %v1260
    %1290 = vmatpush.bf16.msra.mxu0 %v1259
    %1291 = vmatpush.bf16.msra.mxu0 %v1258
    %1292 = vmatpush.bf16.msra.mxu0 %v1257
    %1293 = vmatpush.bf16.msra.mxu0 %v1256
    %1294 = vmatpush.bf16.msra.mxu0 %v1255
    %1295 = vmatmul.bf16.gmra.mxu0 %v1153
    %v1296 = vpop.f32.mrf.mxu0
    %v1297 = vadd.f32 %v1189, %v1296
    %v1298 = vpop.f32.mrf.mxu0
    %v1299 = vadd.f32 %v1189, %v1298
    %1300 = vdwg.mxu0
    %1301 = vmatpush.bf16.msra.mxu0 %v1270
    %1302 = vmatpush.bf16.msra.mxu0 %v1269
    %1303 = vmatpush.bf16.msra.mxu0 %v1268
    %1304 = vmatpush.bf16.msra.mxu0 %v1267
    %1305 = vmatpush.bf16.msra.mxu0 %v1266
    %1306 = vmatpush.bf16.msra.mxu0 %v1265
    %1307 = vmatpush.bf16.msra.mxu0 %v1264
    %1308 = vmatpush.bf16.msra.mxu0 %v1263
    %1309 = vmatmul.bf16.gmra.mxu0 %v1154
    %v1310 = vpop.f32.mrf.mxu0
    %v1311 = vadd.f32 %v1297, %v1310
    %v1312 = vpop.f32.mrf.mxu0
    %v1313 = vadd.f32 %v1299, %v1312
    %1314 = vdwg.mxu0
    %v1315 = vpack.c.bf16 %v1311, %v1311
    %v1316 = vpack.c.bf16 %v1313, %v1313
    %1317 = vst [vmem:[#allocation11] sm:$0xf] %v1315
    %1318 = vst [vmem:[#allocation11 + $0x4] sm:$0xf] %v1316
    // Predicated region
    $region50: #{tpu_custom_call.1} parent=1 // pred_check
      _
    $region51: #{tpu_custom_call.1} parent=1 // pred_check_branch
      %1320 = sbr.rel (0) target = $region53
    $region52: #{tpu_custom_call.1} parent=1 // pred_region
      %1322 = vsyncadd [#allocation4], 0
      %s1323 = sshll.u32 [#allocation11], 4
      %s1324 = int_to_ptr.vmem [resolvable:$true] %s1323
      %s1325 = sshll.u32 %s7, 4
      %s1326 = int_to_ptr.hbm [resolvable:$true] %s1325
      %1331 = dma.vmem_to_hbm [thread:$0]  %s1324, 128, %s1326, [#allocation4], 64, 64, 4
    $region53: #{tpu_custom_call.1} parent=1 // pred_fallthru
      _
    // Predicated region
    $region54: #{tpu_custom_call.1} parent=1 // pred_check
      _
    $region55: #{tpu_custom_call.1} parent=1 // pred_check_branch
      %1333 = sbr.rel (0) target = $region57
    $region56: #{tpu_custom_call.1} parent=1 // pred_region
      %1335 = dma.done [#allocation4], 128
    $region57: #{tpu_custom_call.1} parent=1 // pred_fallthru
      _
    %1336 = vsyncpa [#allocation3], 1
    %1337 = vsyncpa [#allocation6], 1
    %1338 = vsyncpa [#allocation9], 1
    %1339 = vsyncpa [#allocation4], 1

</llo_original>
